<compile_context>
chip_gen: v5e
topology: v5e:2x2
jax: 0.10.0
libtpu: 0.0.40
codegen_flags: <defaults>
</compile_context>

<pallas_src>
import functools

import jax
import jax.numpy as jnp
from jax import lax
from jax.experimental import pallas as pl
from jax.experimental.pallas import tpu as pltpu


def _round_up(x, m):
    return (x + m - 1) // m * m


@functools.cache
def _roll_is_forward() -> bool:
    """Probe pltpu.roll's rotation convention once (jnp.roll-like or not)."""
    def kernel(x_ref, o_ref):
        o_ref[...] = pltpu.roll(x_ref[...], 1, axis=1)

    x = jnp.broadcast_to(jnp.arange(128, dtype=jnp.float32), (8, 128))
    r = pl.pallas_call(
        kernel, out_shape=jax.ShapeDtypeStruct((8, 128), jnp.float32))(x)
    # jnp.roll semantics: result[i] = x[i - shift]  ->  r[0, 0] == 127
    return bool(r[0, 0] == 127.0)


def _make_kernels(H, W, CinP, CoutP, LP, roll_forward):
    """Builds the two per-grid-step kernels for fixed static shapes."""
    Wp = W + 2
    # lane offset of tap (kh, kw) relative to the output pixel inside the
    # flattened padded frame
    taps = [(kh - 1) * Wp + (kw - 1) for kh in range(3) for kw in range(3)]
    # static roll amounts realizing slab[:, q] = frame[:, q + d] at valid q
    amounts = [((-d) % LP) if roll_forward else (d % LP) for d in taps]

    def conv3x3(frame_f32, w_ref, im_ref, cp):
        # 9 lane-rotated taps (XLU) stored as *bf16* slabs into the bf16
        # im2col scratch -> one MXU matmul contracts taps+channels.  Casting
        # at the slab store halves vst traffic / scratch VMEM and removes the
        # old 9x-frame-sized cast at matmul time.
        # TODO(synk): roll the bf16 frame directly (one cast instead of nine)
        # once bf16 lane rotates are confirmed on the target Mosaic version.
        # TODO(synk): for channel-heavy layers (CinP >= ~128) switch to the
        # scratch-free per-tap accumulation (9 matmuls, w packed
        # (9, CoutP, CinP)); for very large frames on v7x, tile the lane axis
        # with a +-(Wp+1) halo so the scratch stays inside 64 MiB VMEM.
        for t, amt in enumerate(amounts):
            slab = frame_f32 if amt == 0 else pltpu.roll(frame_f32, amt, axis=1)
            im_ref[t * cp:(t + 1) * cp, :] = slab.astype(jnp.bfloat16)
        return jnp.dot(w_ref[...], im_ref[...],
                       preferred_element_type=jnp.float32)

    def stats(y, m):
        ym = y * m                        # only real (interior) pixels count
        return (jnp.sum(ym, axis=1, keepdims=True),
                jnp.sum(ym * y, axis=1, keepdims=True))

    def conv1_kernel(xf_ref, w1_ref, mask_ref, y1_ref, s1_ref, q1_ref, im_ref):
        frame = xf_ref[0].astype(jnp.float32)          # bf16 HBM read, f32 math
        y = conv3x3(frame, w1_ref, im_ref, CinP)
        y1_ref[0] = y.astype(jnp.bfloat16)             # bf16 inter-pass store
        s, q = stats(y, mask_ref[0])                   # f32 stats pre-downcast
        s1_ref[0] = s
        q1_ref[0] = q

    def conv2_kernel(y1_ref, sc1_ref, sh1_ref, w2_ref, mask_ref,
                     y2_ref, s2_ref, q2_ref, im_ref):
        m = mask_ref[0]
        a = y1_ref[0].astype(jnp.float32) * sc1_ref[...] + sh1_ref[...]  # BN1
        a = jnp.maximum(a, 0.0) * m      # ReLU; mask doubles as conv2 zero pad
        y = conv3x3(a, w2_ref, im_ref, CoutP)
        y2_ref[0] = y.astype(jnp.bfloat16)
        s, q = stats(y, m)
        s2_ref[0] = s
        q2_ref[0] = q

    return conv1_kernel, conv2_kernel


def init_params(key, num_channels_in, num_channels_out):
    """Deterministic parameter init (HWIO conv weights, BN gamma=1 / beta=0)."""
    k1, k2, k3, k4 = jax.random.split(key, 4)
    return {
        "w1": 0.1 * jax.random.normal(
            k1, (3, 3, num_channels_in, num_channels_out), jnp.float32),
        "b1": 0.1 * jax.random.normal(k2, (num_channels_out,), jnp.float32),
        "w2": 0.1 * jax.random.normal(
            k3, (3, 3, num_channels_out, num_channels_out), jnp.float32),
        "b2": 0.1 * jax.random.normal(k4, (num_channels_out,), jnp.float32),
        "g1": jnp.ones((num_channels_out,), jnp.float32),
        "be1": jnp.zeros((num_channels_out,), jnp.float32),
        "g2": jnp.ones((num_channels_out,), jnp.float32),
        "be2": jnp.zeros((num_channels_out,), jnp.float32),
    }


@functools.partial(jax.jit, static_argnames=("roll_forward",))
def _unet_layer_impl(x_nchw, params, *, roll_forward):
    x = x_nchw.astype(jnp.float32)
    N, Cin, H, W = x.shape
    Cout = params["w1"].shape[-1]
    eps = 1e-5

    Hp, Wp = H + 2, W + 2
    S = Hp * Wp                       # flattened zero-padded frame
    SP = _round_up(S, 128)            # lane-padded frame width (dense vregs)
    CinP = _round_up(Cin, 16)         # 16: bf16 sublane tile -> t*cp slabs align
    CoutP = _round_up(Cout, 16)

    # Pack B images per grid step along lanes (keep >=2 grid steps for v7x's
    # two TensorCores; cap the packed width so blocks stay VMEM-friendly).
    B = max(1, min(-(-2048 // SP), N // 2, max(1, 32768 // SP)))
    G = -(-N // B)                    # grid steps
    Npad = G * B
    LP = B * SP                       # lanes per grid step

    # ---- layout plumbing (cheap XLA glue on small tensors) ----
    xf = jnp.pad(x, ((0, Npad - N), (0, CinP - Cin), (1, 1), (1, 1)))
    xf = jnp.pad(xf.reshape(Npad, CinP, S), ((0, 0), (0, 0), (0, SP - S)))
    xf = xf.reshape(G, B, CinP, SP).transpose(0, 2, 1, 3).reshape(G, CinP, LP)
    xf = xf.astype(jnp.bfloat16)      # bf16 HBM read; MXU input is bf16 anyway

    def pack_w(w, cinp, coutp):       # HWIO -> (coutp, 9*cinp) bf16
        _, _, ci, co = w.shape
        w = jnp.pad(w, ((0, 0), (0, 0), (0, cinp - ci), (0, coutp - co)))
        return w.reshape(9 * cinp, coutp).T.astype(jnp.bfloat16)

    def pad_c(v, fill=0.0):           # (Cout,) -> (CoutP, 1) f32
        return jnp.pad(v, (0, CoutP - Cout), constant_values=fill
                       ).reshape(CoutP, 1).astype(jnp.float32)

    w1 = pack_w(params["w1"], CinP, CoutP)
    w2 = pack_w(params["w2"], CoutP, CoutP)
    # Conv biases b1/b2 are intentionally not used: train-mode BN right after
    # each conv subtracts the batch mean, so the bias cancels exactly.
    g1, g2 = pad_c(params["g1"], 1.0), pad_c(params["g2"], 1.0)
    be1, be2 = pad_c(params["be1"]), pad_c(params["be2"])

    # 1.0 at real interior pixels of *valid* images; 0.0 at the padding halo,
    # the lane tail and batch-padding image slots.  The mask doubles as
    # conv2's zero padding and keeps padded images out of the batch stats.
    m1 = jnp.pad(jnp.ones((H, W), jnp.float32), ((1, 1), (1, 1))).reshape(S)
    m1 = jnp.pad(m1, (0, SP - S))
    valid = (jnp.arange(Npad) < N).astype(jnp.float32)
    mask = (valid[:, None] * m1[None, :]).reshape(G, 1, LP)

    conv1_k, conv2_k = _make_kernels(H, W, CinP, CoutP, LP, roll_forward)

    in_frame = pl.BlockSpec((1, CinP, LP), lambda n: (n, 0, 0))
    mid_frame = pl.BlockSpec((1, CoutP, LP), lambda n: (n, 0, 0))
    mask_spec = pl.BlockSpec((1, 1, LP), lambda n: (n, 0, 0))
    stat = pl.BlockSpec((1, CoutP, 1), lambda n: (n, 0, 0))

    def full(arr):                    # whole (2-D) array, same block every step
        return pl.BlockSpec(arr.shape, lambda n: (0,) * arr.ndim)

    def cparams(cin_p):
        # VMEM budget: double-buffered per-step blocks + resident operands +
        # bf16 im2col scratch; capped for v7x's 64 MiB physical VMEM.
        # TODO(synk): single-buffer the grid-invariant operands
        # (pipeline_mode=pl.Buffered(1)) once verified on the target jax.
        blocks = (cin_p * LP * 2          # input frame block (bf16)
                  + LP * 4                # mask block
                  + CoutP * LP * 2        # output frame block (bf16)
                  + 2 * CoutP * 4         # stats blocks
                  + 9 * cin_p * CoutP * 2  # resident weights (bf16)
                  + 2 * CoutP * 4)        # resident BN affine (pass 2)
        scratch = 9 * cin_p * LP * 2
        return pltpu.CompilerParams(
            dimension_semantics=("parallel",),   # grid steps independent
            vmem_limit_bytes=int(min(2 * blocks + scratch + (16 << 20),
                                     48 << 20)))

    stat_shape = jax.ShapeDtypeStruct((G, CoutP, 1), jnp.float32)
    frame_shape = jax.ShapeDtypeStruct((G, CoutP, LP), jnp.bfloat16)

    # ---- pass 1: conv1 + per-step masked sum / sum-of-squares ----
    y1, s1, q1 = pl.pallas_call(
        conv1_k,
        grid=(G,),
        in_specs=[in_frame, full(w1), mask_spec],
        out_specs=[mid_frame, stat, stat],
        out_shape=[frame_shape, stat_shape, stat_shape],
        scratch_shapes=[pltpu.VMEM((9 * CinP, LP), jnp.bfloat16)],
        compiler_params=cparams(CinP),
    )(xf, w1, mask)

    count = jnp.float32(N * H * W)

    def bn_affine(s, q, gamma, beta):
        # batch statistics -> per-channel affine (y * scale + shift)
        mean = jnp.sum(s, axis=0) / count
        # clamp: E[y^2]-E[y]^2 can dip slightly negative with bf16 MXU inputs
        var = jnp.maximum(jnp.sum(q, axis=0) / count - mean * mean, 0.0)
        scale = gamma * lax.rsqrt(var + eps)
        return scale, beta - mean * scale

    sc1, sh1 = bn_affine(s1, q1, g1, be1)

    # ---- pass 2: bn1 + relu + conv2 + per-step masked stats ----
    y2, s2, q2 = pl.pallas_call(
        conv2_k,
        grid=(G,),
        in_specs=[mid_frame, full(sc1), full(sh1), full(w2), mask_spec],
        out_specs=[mid_frame, stat, stat],
        out_shape=[frame_shape, stat_shape, stat_shape],
        scratch_shapes=[pltpu.VMEM((9 * CoutP, LP), jnp.bfloat16)],
        compiler_params=cparams(CoutP),
    )(y1, sc1, sh1, w2, mask)

    sc2, sh2 = bn_affine(s2, q2, g2, be2)

    # ---- epilogue: bn2 + relu fused with the crop in plain XLA (pure VPU /
    # layout work; doing it here removes a full-frame HBM write + re-read) ----
    y2u = y2.reshape(G, CoutP, B, SP).transpose(0, 2, 1, 3)
    y2u = y2u.reshape(Npad, CoutP, SP)[:N, :Cout, :S].astype(jnp.float32)
    y2u = y2u.reshape(N, Cout, Hp, Wp)[:, :, 1:H + 1, 1:W + 1]
    scale = sc2[:Cout, 0].reshape(1, Cout, 1, 1)
    shift = sh2[:Cout, 0].reshape(1, Cout, 1, 1)
    return jnp.maximum(y2u * scale + shift, 0.0)


def unet_layer_forward(x_nchw, params):
    """NCHW in / NCHW out, matching the PyTorch UNetLayer (ndims=2) forward."""
    return _unet_layer_impl(x_nchw, params, roll_forward=_roll_is_forward())


def _reference_forward(x_nchw, params, eps=1e-5):
    """Pure-JAX f32 reference (train-mode BN), for correctness checking."""
    x = jnp.transpose(x_nchw, (0, 2, 3, 1)).astype(jnp.float32)
    dn = ("NHWC", "HWIO", "NHWC")

    def block(h, w, b, g, be):
        y = lax.conv_general_dilated(h, w, (1, 1), "SAME",
                                     dimension_numbers=dn) + b
        mean = jnp.mean(y, axis=(0, 1, 2))
        var = jnp.mean((y - mean) ** 2, axis=(0, 1, 2))
        y = (y - mean) * lax.rsqrt(var + eps) * g + be
        return jnp.maximum(y, 0.0)

    h = block(x, params["w1"], params["b1"], params["g1"], params["be1"])
    h = block(h, params["w2"], params["b2"], params["g2"], params["be2"])
    return jnp.transpose(h, (0, 3, 1, 2))


def _check(x, params, shape):
    out = jax.block_until_ready(unet_layer_forward(x, params))
    ref = _reference_forward(x, params)
    assert out.shape == shape, out.shape
    err = jnp.abs(out - ref)
    max_err, mean_err = float(jnp.max(err)), float(jnp.mean(err))
    # bf16 MXU inputs + bf16 inter-pass intermediates vs. an f32 reference on
    # BN-normalized O(1) values -> tolerant elementwise + tight mean check.
    assert jnp.allclose(out, ref, atol=1e-1, rtol=1e-1), (max_err, mean_err)
    assert mean_err < 1.5e-2, (max_err, mean_err)


if __name__ == "__main__":
    key = jax.random.PRNGKey(0)
    kx, kp = jax.random.split(key)

    # Primary case (B=1 image per grid step, 2 grid steps).
    N, Cin, Cout, H, W = 2, 4, 8, 16, 16
    x = jax.random.normal(kx, (N, Cin, H, W), jnp.float32)
    params = init_params(kp, Cin, Cout)
    _check(x, params, (N, Cout, H, W))

    # Second case exercising lane-packing (B=2) and a ragged (padded) batch.
    kx2, kp2 = jax.random.split(jax.random.PRNGKey(1))
    N2, Cin2, Cout2, H2, W2 = 5, 3, 8, 8, 8
    x2 = jax.random.normal(kx2, (N2, Cin2, H2, W2), jnp.float32)
    params2 = init_params(kp2, Cin2, Cout2)
    _check(x2, params2, (N2, Cout2, H2, W2))

    print("KERNEL_OK")
</pallas_src>

<mosaic_0001>
module attributes {stable_mosaic.version = 11 : i64} {
  func.func @kernel(%arg0: memref<8x128xf32, #tpu.memory_space<vmem>>, %arg1: memref<8x128xf32, #tpu.memory_space<vmem>>) attributes {dimension_semantics = [], scalar_prefetch = 0 : i64, scratch_operands = 0 : i64, tpu.core_type = #tpu.core_type<tc>} {
    %c0 = arith.constant 0 : index
    %c0_0 = arith.constant 0 : index
    %0 = vector.load %arg0[%c0, %c0_0] : memref<8x128xf32, #tpu.memory_space<vmem>>, vector<8x128xf32>
    %c1_i32 = arith.constant 1 : i32
    %1 = tpu.dynamic_rotate %0 by %c1_i32 dim 1 : vector<8x128xf32>, i32 -> vector<8x128xf32>
    %c0_1 = arith.constant 0 : index
    %c0_2 = arith.constant 0 : index
    %2 = vector.load %arg1[%c0_1, %c0_2] : memref<8x128xf32, #tpu.memory_space<vmem>>, vector<8x128xf32>
    tpu.vector_store %arg1[%c0_1, %c0_2], %1 {strides = array<i32>} : memref<8x128xf32, #tpu.memory_space<vmem>>, vector<8x128xf32>,
    return
  }
}

</mosaic_0001>

<llo_original>
// kernel: tpu_custom_call.1
$region0: #{tpu_custom_call.1}
  #allocation0 [shape = 'u32[]', space=smem, size = 0x4, offset = 0x4, fixed_abs, tag = 'smem constant byte address 0x4 - core index']
  #allocation1 [shape = 'u32[72,128]{1,0:T(1,128)}', space=vmem, size = 0x9000, scoped, tag = 'internal scratch']
  %s0 = inlined_call_operand.hbm [shape: f32[8,128], index: 0, kind: input, shape index: {}]
  %s1 = inlined_call_operand.hbm [shape: f32[8,128], index: 1, kind: output, shape index: {}]
  %s2 = sld [smem:[#allocation0]]
  $region18: #{tpu_custom_call.1} parent=0
    _
  %s4 = ssub.s32 1, %s2
  %s5 = scalar_select 0, %s4, %s2
  $region1: #{tpu_custom_call.1} parent=0
    #allocation2 [shape = 'u8[4096]{0}', space=vmem, size = 0x1000, scoped, tag = 'input window, operand 0, single buffered']
    #allocation3 [shape = 's32[1]{0}', space=sflag, size = 0x4, scoped, tag = 'scoped memory for tpu_custom_call.1']
    #allocation4 [shape = 's32[1]{0}', space=sflag, size = 0x4, scoped, tag = 'scoped memory for tpu_custom_call.1']
    #allocation5 [shape = 'u8[4096]{0}', space=vmem, size = 0x1000, scoped, tag = 'output window, operand 0, single buffered']
    %6 = vsyncpa [#allocation3], 0
    %7 = vsyncpa [#allocation4], 0
    // Predicated region
    $region2: #{tpu_custom_call.1} parent=1 // pred_check
      _
    $region3: #{tpu_custom_call.1} parent=1 // pred_check_branch
      %9 = sbr.rel (0) target = $region5
    $region4: #{tpu_custom_call.1} parent=1 // pred_region
      %11 = vsyncadd [#allocation3], 0
      %s13 = sshll.u32 %s0, 4
      %s14 = int_to_ptr.hbm [resolvable:$true] %s13
      %s15 = sshll.u32 [#allocation2], 4
      %s16 = int_to_ptr.vmem [resolvable:$true] %s15
      %18 = dma.hbm_to_vmem [thread:$0]  %s14, 128, %s16, [#allocation3]
    $region5: #{tpu_custom_call.1} parent=1 // pred_fallthru
      _
    // Predicated region
    $region6: #{tpu_custom_call.1} parent=1 // pred_check
      _
    $region7: #{tpu_custom_call.1} parent=1 // pred_check_branch
      %20 = sbr.rel (0) target = $region9
    $region8: #{tpu_custom_call.1} parent=1 // pred_region
      %22 = dma.done [#allocation3], 128
    $region9: #{tpu_custom_call.1} parent=1 // pred_fallthru
      _
    %v23 = vld [vmem:[#allocation2] sm:$0xff]
    %24 = vrot.lane.b32.xlu0 %v23, 1
    %v25 = vpop.permute.xlu0 %24
    %26 = vst [vmem:[#allocation5] sm:$0xff] %v25
    // Predicated region
    $region10: #{tpu_custom_call.1} parent=1 // pred_check
      _
    $region11: #{tpu_custom_call.1} parent=1 // pred_check_branch
      %28 = sbr.rel (0) target = $region13
    $region12: #{tpu_custom_call.1} parent=1 // pred_region
      %30 = vsyncadd [#allocation4], 0
      %s32 = sshll.u32 [#allocation5], 4
      %s33 = int_to_ptr.vmem [resolvable:$true] %s32
      %s34 = sshll.u32 %s1, 4
      %s35 = int_to_ptr.hbm [resolvable:$true] %s34
      %37 = dma.vmem_to_hbm [thread:$0]  %s33, 128, %s35, [#allocation4]
    $region13: #{tpu_custom_call.1} parent=1 // pred_fallthru
      _
    // Predicated region
    $region14: #{tpu_custom_call.1} parent=1 // pred_check
      _
    $region15: #{tpu_custom_call.1} parent=1 // pred_check_branch
      %39 = sbr.rel (0) target = $region17
    $region16: #{tpu_custom_call.1} parent=1 // pred_region
      %41 = dma.done [#allocation4], 128
    $region17: #{tpu_custom_call.1} parent=1 // pred_fallthru
      _
    %42 = vsyncpa [#allocation3], 1
    %43 = vsyncpa [#allocation4], 1

</llo_original>
